<compile_context>
chip_gen: v6e
topology: v6e:2x2x1
jax: 0.10.0
libtpu: 0.0.40
codegen_flags: <defaults>
</compile_context>

<pallas_src>
import functools

import jax
import jax.numpy as jnp
from jax import lax
from jax.experimental import pallas as pl
from jax.experimental.pallas import tpu as pltpu


def _l2norm(t):
    # F.normalize(dim=-1, eps=1e-12): t / max(||t||, 1e-12)
    #   == t * rsqrt(max(||t||^2, 1e-24))   (1e-24 is representable in f32)
    s = jnp.sum(t * t, axis=-1, keepdims=True)
    return t * lax.rsqrt(jnp.maximum(s, 1e-24))


# ---------------- fused training kernel: center_iter + k/v projection ----------------
def _make_irca_train_kernel(mxu_dtype):
    def kernel(x_ref, means_ref, w_ref, out_ref, xn1_ref):
        # x_ref:     (B*L, D)      normed_x, flattened in the wrapper
        # means_ref: (C, D)        x_means (un-normalized)
        # w_ref:     (QK + D, D)   concat([Wk, Wv], axis=0), PyTorch (out, in)
        # out_ref:   (C, D+QK+D)   [x_global | k | v]  (single lane-dense slab)
        # xn1_ref:   (B*L, D+1)    VMEM scratch = [xn | 1]  (fused counts lane)
        x = x_ref[...].astype(jnp.float32)
        means = means_ref[...].astype(jnp.float32)

        BL, D = x.shape
        C = means.shape[0]

        xn = _l2norm(x)       # F.normalize(x, dim=-1)
        mn = _l2norm(means)   # F.normalize(x_means, dim=-1)

        # dists = einsum('nd,cd->nc'); operands kept f32: this matmul drives a
        # discrete argmax, so we do not downcast it even in bf16 mode.
        dists = lax.dot_general(xn, mn, (((1,), (1,)), ((), ())),
                                preferred_element_type=jnp.float32)       # (BL, C)

        # argmax over C, first maximal index (matches torch.max tie-break).
        col = lax.broadcasted_iota(jnp.int32, (BL, C), 1)
        mx = jnp.max(dists, axis=-1, keepdims=True)                       # (BL, 1)
        buckets = jnp.min(jnp.where(dists >= mx, col, C), axis=-1,
                          keepdims=True)                                  # (BL, 1)
        onehot = (col == buckets).astype(mxu_dtype)                       # (BL, C)

        # Fused scatter_add + bincount: build [xn | 1] in scratch via two
        # static slice stores (no in-register lane concat), then ONE matmul
        # contracting B*L.  Column D of the result is the per-cluster count.
        xn1_ref[...] = jnp.ones((BL, D + 1), mxu_dtype)
        xn1_ref[:, :D] = xn.astype(mxu_dtype)
        ms_c = lax.dot_general(onehot, xn1_ref[...], (((0,), (0,)), ((), ())),
                               preferred_element_type=jnp.float32)        # (C, D+1)
        means_sum = ms_c[:, :D]                                           # (C, D)
        counts = ms_c[:, D:]                                              # (C, 1) exact ints

        means_new = _l2norm(means_sum)                                    # F.normalize
        x_global = jnp.where(counts == 0.0, mn, means_new)                # (C, D)

        # Fused k/v projection: single MXU matmul on concatenated weights.
        kv = lax.dot_general(x_global.astype(mxu_dtype),
                             w_ref[...].astype(mxu_dtype),
                             (((1,), (1,)), ((), ())),
                             preferred_element_type=jnp.float32)          # (C, QK+D)

        # One output ref -> one writeback DMA; static slice stores.
        out_ref[:, :D] = x_global
        out_ref[:, D:] = kv

    return kernel


def prepare_irca_weights(w_k, w_v):
    """Hoisted out of the forward path: concat Wk/Wv once at module init."""
    return jnp.concatenate([w_k, w_v], axis=0).astype(jnp.float32)


# ---------------- IRCA forward wrapper ----------------
@functools.partial(jax.jit,
                   static_argnames=("qk_dim", "heads", "training", "mxu_dtype"))
def irca_forward(normed_x, x_means, w_cat, *, qk_dim, heads, training=True,
                 mxu_dtype=jnp.float32):
    """Returns (k, v, x_global) matching IRCA.forward.

    k: (heads, C, qk_dim // heads)
    v: (heads, C, dim   // heads)
    x_global: (C, dim)
    """
    B, L, D = normed_x.shape
    C = x_means.shape[0]
    QK = qk_dim
    assert w_cat.shape == (QK + D, D)

    if training:
        x_flat = normed_x.reshape(B * L, D)     # layout plumbing in the wrapper
        vmem = pl.BlockSpec(memory_space=pltpu.MemorySpace.VMEM)
        out = pl.pallas_call(
            _make_irca_train_kernel(mxu_dtype),
            out_shape=jax.ShapeDtypeStruct((C, D + QK + D), jnp.float32),
            in_specs=[vmem, vmem, vmem],
            out_specs=vmem,
            scratch_shapes=[pltpu.VMEM((B * L, D + 1), mxu_dtype)],
        )(x_flat, x_means, w_cat)
        x_global = out[:, :D]
        kv = out[:, D:]
    else:
        # Eval: x_global = x_means (un-normalized), projections only.  The
        # (C, D) @ (D, QK+D) matmul is ~32 KFLOP -- cheaper than a pallas_call
        # boundary, and plain JAX lets XLA fuse it with downstream ops.
        x_global = x_means
        kv = jnp.einsum("cd,od->co", x_means.astype(jnp.float32), w_cat)

    # rearrange 'n (h dim_head) -> h n dim_head'
    k = kv[:, :QK].reshape(C, heads, QK // heads).transpose(1, 0, 2)
    v = kv[:, QK:].reshape(C, heads, D // heads).transpose(1, 0, 2)
    return k, v, x_global


if __name__ == "__main__":
    # Small deterministic shapes consistent with the module.
    B, L = 2, 32          # batch, sequence length
    DIM = 32              # dim
    QK_DIM = 32           # qk_dim
    HEADS = 4             # heads
    C = 8                 # number of cluster centers (x_means rows)

    key = jax.random.PRNGKey(0)
    k1, k2, k3, k4 = jax.random.split(key, 4)

    normed_x = jax.random.normal(k1, (B, L, DIM), dtype=jnp.float32)
    x_means = jax.random.normal(k2, (C, DIM), dtype=jnp.float32)

    # Deterministic synthetic parameters (PyTorch Linear layout: (out, in)).
    w_k = jax.random.normal(k3, (QK_DIM, DIM), dtype=jnp.float32) * (1.0 / DIM ** 0.5)
    w_v = jax.random.normal(k4, (DIM, DIM), dtype=jnp.float32) * (1.0 / DIM ** 0.5)

    # Weight concat hoisted to "module init" (done once, not per forward call).
    w_cat = prepare_irca_weights(w_k, w_v)

    # Training-mode path, f32 MXU operands (reference-exact configuration).
    k_out, v_out, x_global = irca_forward(
        normed_x, x_means, w_cat, qk_dim=QK_DIM, heads=HEADS,
        training=True, mxu_dtype=jnp.float32)
    jax.block_until_ready((k_out, v_out, x_global))

    # Eval-mode path (x_global = x_means, plain-JAX projections).
    k_e, v_e, xg_e = irca_forward(
        normed_x, x_means, w_cat, qk_dim=QK_DIM, heads=HEADS, training=False)
    jax.block_until_ready((k_e, v_e, xg_e))

    # bf16-MXU-operand path (v6e/v7x recommendation); dists stay f32 so the
    # bucket assignment is identical, remaining error is bf16-rounding scale.
    k_b, v_b, xg_b = irca_forward(
        normed_x, x_means, w_cat, qk_dim=QK_DIM, heads=HEADS,
        training=True, mxu_dtype=jnp.bfloat16)
    jax.block_until_ready((k_b, v_b, xg_b))

    # Shape checks.
    assert k_out.shape == (HEADS, C, QK_DIM // HEADS)
    assert v_out.shape == (HEADS, C, DIM // HEADS)
    assert x_global.shape == (C, DIM)
    assert k_e.shape == (HEADS, C, QK_DIM // HEADS)

    # Pure-JAX reference (verifies forward-pass semantics of the fused kernel).
    def ref_forward(nx, xm, wk, wv, heads):
        def l2n(t):
            return t / jnp.maximum(
                jnp.sqrt(jnp.sum(t * t, axis=-1, keepdims=True)), 1e-12)
        xn = l2n(nx)
        mn = l2n(xm)
        dists = jnp.einsum('bld,cd->blc', xn, mn)
        buckets = jnp.argmax(dists, axis=-1).reshape(-1)
        onehot = jax.nn.one_hot(buckets, xm.shape[0], dtype=jnp.float32)
        counts = onehot.sum(0)
        msum = onehot.T @ xn.reshape(-1, nx.shape[-1])
        xg = jnp.where((counts == 0)[:, None], mn, l2n(msum))
        kk = (xg @ wk.T).reshape(xm.shape[0], heads, -1).transpose(1, 0, 2)
        vv = (xg @ wv.T).reshape(xm.shape[0], heads, -1).transpose(1, 0, 2)
        return kk, vv, xg

    k_ref, v_ref, xg_ref = ref_forward(normed_x, x_means, w_k, w_v, HEADS)
    assert jnp.allclose(x_global, xg_ref, atol=2e-4, rtol=2e-4)
    assert jnp.allclose(k_out, k_ref, atol=2e-4, rtol=2e-4)
    assert jnp.allclose(v_out, v_ref, atol=2e-4, rtol=2e-4)

    k_e_ref = (x_means @ w_k.T).reshape(C, HEADS, -1).transpose(1, 0, 2)
    v_e_ref = (x_means @ w_v.T).reshape(C, HEADS, -1).transpose(1, 0, 2)
    assert jnp.allclose(k_e, k_e_ref, atol=2e-4, rtol=2e-4)
    assert jnp.allclose(v_e, v_e_ref, atol=2e-4, rtol=2e-4)
    assert jnp.allclose(xg_e, x_means)

    # bf16 MXU-operand variant: same buckets, values within bf16 rounding.
    assert jnp.allclose(xg_b, xg_ref, atol=5e-2, rtol=5e-2)
    assert jnp.allclose(k_b, k_ref, atol=5e-2, rtol=5e-2)
    assert jnp.allclose(v_b, v_ref, atol=5e-2, rtol=5e-2)

    print("KERNEL_OK")
</pallas_src>

<mosaic_0001>
module attributes {stable_mosaic.version = 11 : i64} {
  func.func @kernel(%arg0: memref<64x32xf32, #tpu.memory_space<vmem>>, %arg1: memref<8x32xf32, #tpu.memory_space<vmem>>, %arg2: memref<64x32xf32, #tpu.memory_space<vmem>>, %arg3: memref<8x96xf32, #tpu.memory_space<vmem>>, %arg4: memref<64x33xf32, #tpu.memory_space<vmem>>) attributes {dimension_semantics = [], scalar_prefetch = 0 : i64, scratch_operands = 1 : i64, tpu.core_type = #tpu.core_type<tc>} {
    %c0 = arith.constant 0 : index
    %c0_0 = arith.constant 0 : index
    %0 = vector.load %arg0[%c0, %c0_0] : memref<64x32xf32, #tpu.memory_space<vmem>>, vector<64x32xf32>
    %c0_1 = arith.constant 0 : index
    %c0_2 = arith.constant 0 : index
    %1 = vector.load %arg1[%c0_1, %c0_2] : memref<8x32xf32, #tpu.memory_space<vmem>>, vector<8x32xf32>
    %2 = arith.mulf %0, %0 : vector<64x32xf32>
    %cst = arith.constant dense<0.000000e+00> : vector<64xf32>
    %3 = vector.multi_reduction <add>, %2, %cst [1] : vector<64x32xf32> to vector<64xf32>
    %4 = vector.shape_cast %3 : vector<64xf32> to vector<64x1xf32>
    %cst_3 = arith.constant 1.000000e-24 : f32
    %5 = vector.broadcast %cst_3 : f32 to vector<64x1xf32>
    %6 = arith.maximumf %4, %5 : vector<64x1xf32>
    %7 = math.rsqrt %6 : vector<64x1xf32>
    %8 = vector.broadcast %7 : vector<64x1xf32> to vector<64x32xf32>
    %9 = arith.mulf %0, %8 : vector<64x32xf32>
    %10 = arith.mulf %1, %1 : vector<8x32xf32>
    %cst_4 = arith.constant dense<0.000000e+00> : vector<8xf32>
    %11 = vector.multi_reduction <add>, %10, %cst_4 [1] : vector<8x32xf32> to vector<8xf32>
    %12 = vector.shape_cast %11 : vector<8xf32> to vector<8x1xf32>
    %cst_5 = arith.constant 1.000000e-24 : f32
    %13 = vector.broadcast %cst_5 : f32 to vector<8x1xf32>
    %14 = arith.maximumf %12, %13 : vector<8x1xf32>
    %15 = math.rsqrt %14 : vector<8x1xf32>
    %16 = vector.broadcast %15 : vector<8x1xf32> to vector<8x32xf32>
    %17 = arith.mulf %1, %16 : vector<8x32xf32>
    %cst_6 = arith.constant dense<0.000000e+00> : vector<64x8xf32>
    %18 = tpu.matmul %9, %17, %cst_6 {dimension_numbers = #tpu.dot_dimension_numbers<[1], [1], [0], [0], [0, 0, 1, 0], [], []>} : vector<64x32xf32>, vector<8x32xf32>, vector<64x8xf32> -> vector<64x8xf32>
    %19 = tpu.iota {dimensions = array<i32: 1>} : vector<64x8xi32>
    %cst_7 = arith.constant dense<0xFF800000> : vector<64xf32>
    %20 = vector.multi_reduction <maximumf>, %18, %cst_7 [1] : vector<64x8xf32> to vector<64xf32>
    %21 = vector.shape_cast %20 : vector<64xf32> to vector<64x1xf32>
    %22 = vector.broadcast %21 : vector<64x1xf32> to vector<64x8xf32>
    %23 = arith.cmpf oge, %18, %22 : vector<64x8xf32>
    %c8_i32 = arith.constant 8 : i32
    %24 = vector.broadcast %c8_i32 : i32 to vector<64x8xi32>
    %25 = arith.select %23, %19, %24 : vector<64x8xi1>, vector<64x8xi32>
    %cst_8 = arith.constant dense<2147483647> : vector<64xi32>
    %26 = vector.multi_reduction <minsi>, %25, %cst_8 [1] : vector<64x8xi32> to vector<64xi32>
    %27 = vector.shape_cast %26 : vector<64xi32> to vector<64x1xi32>
    %28 = vector.broadcast %27 : vector<64x1xi32> to vector<64x8xi32>
    %29 = arith.cmpi eq, %19, %28 : vector<64x8xi32>
    %30 = arith.extui %29 : vector<64x8xi1> to vector<64x8xi32>
    %31 = arith.sitofp %30 : vector<64x8xi32> to vector<64x8xf32>
    %cst_9 = arith.constant 1.000000e+00 : f32
    %32 = vector.broadcast %cst_9 : f32 to vector<64x33xf32>
    %c0_10 = arith.constant 0 : index
    %c0_11 = arith.constant 0 : index
    %33 = vector.load %arg4[%c0_10, %c0_11] : memref<64x33xf32, #tpu.memory_space<vmem>>, vector<64x33xf32>
    tpu.vector_store %arg4[%c0_10, %c0_11], %32 {strides = array<i32>} : memref<64x33xf32, #tpu.memory_space<vmem>>, vector<64x33xf32>,
    %c0_12 = arith.constant 0 : index
    %c0_13 = arith.constant 0 : index
    %34 = vector.load %arg4[%c0_12, %c0_13] : memref<64x33xf32, #tpu.memory_space<vmem>>, vector<64x32xf32>
    tpu.vector_store %arg4[%c0_12, %c0_13], %9 {strides = array<i32>} : memref<64x33xf32, #tpu.memory_space<vmem>>, vector<64x32xf32>,
    %c0_14 = arith.constant 0 : index
    %c0_15 = arith.constant 0 : index
    %35 = vector.load %arg4[%c0_14, %c0_15] : memref<64x33xf32, #tpu.memory_space<vmem>>, vector<64x33xf32>
    %cst_16 = arith.constant dense<0.000000e+00> : vector<8x33xf32>
    %36 = tpu.matmul %31, %35, %cst_16 {dimension_numbers = #tpu.dot_dimension_numbers<[0], [0], [1], [1], [0, 1, 1, 1], [], []>} : vector<64x8xf32>, vector<64x33xf32>, vector<8x33xf32> -> vector<8x33xf32>
    %37 = vector.extract_strided_slice %36 {offsets = [0, 0], sizes = [8, 32], strides = [1, 1]} : vector<8x33xf32> to vector<8x32xf32>
    %38 = vector.extract_strided_slice %36 {offsets = [0, 32], sizes = [8, 1], strides = [1, 1]} : vector<8x33xf32> to vector<8x1xf32>
    %39 = arith.mulf %37, %37 : vector<8x32xf32>
    %cst_17 = arith.constant dense<0.000000e+00> : vector<8xf32>
    %40 = vector.multi_reduction <add>, %39, %cst_17 [1] : vector<8x32xf32> to vector<8xf32>
    %41 = vector.shape_cast %40 : vector<8xf32> to vector<8x1xf32>
    %cst_18 = arith.constant 1.000000e-24 : f32
    %42 = vector.broadcast %cst_18 : f32 to vector<8x1xf32>
    %43 = arith.maximumf %41, %42 : vector<8x1xf32>
    %44 = math.rsqrt %43 : vector<8x1xf32>
    %45 = vector.broadcast %44 : vector<8x1xf32> to vector<8x32xf32>
    %46 = arith.mulf %37, %45 : vector<8x32xf32>
    %cst_19 = arith.constant 0.000000e+00 : f32
    %47 = vector.broadcast %cst_19 : f32 to vector<8x1xf32>
    %48 = arith.cmpf oeq, %38, %47 : vector<8x1xf32>
    %49 = vector.shape_cast %48 : vector<8x1xi1> to vector<8x1xi1>
    %50 = vector.broadcast %49 : vector<8x1xi1> to vector<8x32xi1>
    %51 = arith.select %50, %17, %46 : vector<8x32xi1>, vector<8x32xf32>
    %c0_20 = arith.constant 0 : index
    %c0_21 = arith.constant 0 : index
    %52 = vector.load %arg2[%c0_20, %c0_21] : memref<64x32xf32, #tpu.memory_space<vmem>>, vector<64x32xf32>
    %cst_22 = arith.constant dense<0.000000e+00> : vector<8x64xf32>
    %53 = tpu.matmul %51, %52, %cst_22 {dimension_numbers = #tpu.dot_dimension_numbers<[1], [1], [0], [0], [0, 0, 1, 0], [], []>} : vector<8x32xf32>, vector<64x32xf32>, vector<8x64xf32> -> vector<8x64xf32>
    %c0_23 = arith.constant 0 : index
    %c0_24 = arith.constant 0 : index
    %54 = vector.load %arg3[%c0_23, %c0_24] : memref<8x96xf32, #tpu.memory_space<vmem>>, vector<8x32xf32>
    tpu.vector_store %arg3[%c0_23, %c0_24], %51 {strides = array<i32>} : memref<8x96xf32, #tpu.memory_space<vmem>>, vector<8x32xf32>,
    %c0_25 = arith.constant 0 : index
    %c32 = arith.constant 32 : index
    %55 = vector.load %arg3[%c0_25, %c32] : memref<8x96xf32, #tpu.memory_space<vmem>>, vector<8x64xf32>
    tpu.vector_store %arg3[%c0_25, %c32], %53 {strides = array<i32>} : memref<8x96xf32, #tpu.memory_space<vmem>>, vector<8x64xf32>,
    return
  }
}

</mosaic_0001>

<llo_original>
// kernel: irca_forward.1
$region0: #{irca_forward.1}
  #allocation0 [shape = 'u32[]', space=smem, size = 0x4, offset = 0x4, fixed_abs, tag = 'smem constant byte address 0x4 - core index']
  #allocation1 [shape = 'u32[144,128]{1,0:T(1,128)}', space=vmem, size = 0x12000, scoped, tag = 'internal scratch']
  #allocation2 [shape = 'f32[64,33]{1,0:T(8,128)}', space=vmem, size = 0x8000, scoped, tag = 'scratch operand']
  %s0 = inlined_call_operand.vmem [shape: f32[64,32], index: 0, kind: input, shape index: {}]
  %s1 = inlined_call_operand.vmem [shape: f32[8,32], index: 1, kind: input, shape index: {}]
  %s2 = inlined_call_operand.vmem [shape: f32[64,32], index: 2, kind: input, shape index: {}]
  %s3 = inlined_call_operand.vmem [shape: f32[8,96], index: 3, kind: output, shape index: {}]
  %s4 = sld [smem:[#allocation0]]
  $region22: #{irca_forward.1} parent=0
    _
  %s6 = ssub.s32 1, %s4
  %s7 = scalar_select 0, %s6, %s4
  // Predicated region
  $region2: #{irca_forward.1} parent=0 // pred_check
    _
  $region3: #{irca_forward.1} parent=0 // pred_check_branch
    %9 = sbr.rel (0) target = $region5
  $region4: #{irca_forward.1} parent=0 // pred_region
    _
  $region5: #{irca_forward.1} parent=0 // pred_fallthru
    _
  // Predicated region
  $region6: #{irca_forward.1} parent=0 // pred_check
    _
  $region7: #{irca_forward.1} parent=0 // pred_check_branch
    %11 = sbr.rel (0) target = $region9
  $region8: #{irca_forward.1} parent=0 // pred_region
    _
  $region9: #{irca_forward.1} parent=0 // pred_fallthru
    _
  // Predicated region
  $region10: #{irca_forward.1} parent=0 // pred_check
    _
  $region11: #{irca_forward.1} parent=0 // pred_check_branch
    %13 = sbr.rel (0) target = $region13
  $region12: #{irca_forward.1} parent=0 // pred_region
    _
  $region13: #{irca_forward.1} parent=0 // pred_fallthru
    _
  %v14 = vld [vmem:[%s0] sm:$0xff]
  %v15 = vld [vmem:[%s0 + $0x8] sm:$0xff]
  %v16 = vld [vmem:[%s0 + $0x10] sm:$0xff]
  %v17 = vld [vmem:[%s0 + $0x18] sm:$0xff]
  %v18 = vld [vmem:[%s0 + $0x20] sm:$0xff]
  %v19 = vld [vmem:[%s0 + $0x28] sm:$0xff]
  %v20 = vld [vmem:[%s0 + $0x30] sm:$0xff]
  %v21 = vld [vmem:[%s0 + $0x38] sm:$0xff]
  %v22 = vld [vmem:[%s1] sm:$0xff]
  %v23 = vmul.f32 %v14, %v14
  %v24 = vmul.f32 %v15, %v15
  %v25 = vmul.f32 %v16, %v16
  %v26 = vmul.f32 %v17, %v17
  %v27 = vmul.f32 %v18, %v18
  %v28 = vmul.f32 %v19, %v19
  %v29 = vmul.f32 %v20, %v20
  %v30 = vmul.f32 %v21, %v21
  %vm31 = vcmask 261120
  %v32 = vsel %vm31, %v23, 0.0
  %33 = vadd.xlane.f32.xlu0 %v32
  %v34 = vpop.xlane.xlu0 %33
  %v35 = vsel %vm31, %v24, 0.0
  %36 = vadd.xlane.f32.xlu0 %v35
  %v37 = vpop.xlane.xlu0 %36
  %v38 = vsel %vm31, %v25, 0.0
  %39 = vadd.xlane.f32.xlu0 %v38
  %v40 = vpop.xlane.xlu0 %39
  %v41 = vsel %vm31, %v26, 0.0
  %42 = vadd.xlane.f32.xlu0 %v41
  %v43 = vpop.xlane.xlu0 %42
  %v44 = vsel %vm31, %v27, 0.0
  %45 = vadd.xlane.f32.xlu0 %v44
  %v46 = vpop.xlane.xlu0 %45
  %v47 = vsel %vm31, %v28, 0.0
  %48 = vadd.xlane.f32.xlu0 %v47
  %v49 = vpop.xlane.xlu0 %48
  %v50 = vsel %vm31, %v29, 0.0
  %51 = vadd.xlane.f32.xlu0 %v50
  %v52 = vpop.xlane.xlu0 %51
  %v53 = vsel %vm31, %v30, 0.0
  %54 = vadd.xlane.f32.xlu0 %v53
  %v55 = vpop.xlane.xlu0 %54
  %v56 = vmax.f32 %v34, 1e-24
  %v57 = vmax.f32 %v37, 1e-24
  %v58 = vmax.f32 %v40, 1e-24
  %v59 = vmax.f32 %v43, 1e-24
  %v60 = vmax.f32 %v46, 1e-24
  %v61 = vmax.f32 %v49, 1e-24
  %v62 = vmax.f32 %v52, 1e-24
  %v63 = vmax.f32 %v55, 1e-24
  %v64 = vrsqrt.pop %v56
  %v65 = vrsqrt.pop %v57
  %v66 = vrsqrt.pop %v58
  %v67 = vrsqrt.pop %v59
  %v68 = vrsqrt.pop %v60
  %v69 = vrsqrt.pop %v61
  %v70 = vrsqrt.pop %v62
  %v71 = vrsqrt.pop %v63
  %v72 = vmul.f32 %v14, %v64
  %v73 = vmul.f32 %v15, %v65
  %v74 = vmul.f32 %v16, %v66
  %v75 = vmul.f32 %v17, %v67
  %v76 = vmul.f32 %v18, %v68
  %v77 = vmul.f32 %v19, %v69
  %v78 = vmul.f32 %v20, %v70
  %v79 = vmul.f32 %v21, %v71
  %v80 = vmul.f32 %v22, %v22
  %v81 = vsel %vm31, %v80, 0.0
  %82 = vadd.xlane.f32.xlu0 %v81
  %v83 = vpop.xlane.xlu0 %82
  %v84 = vmax.f32 %v83, 1e-24
  %v85 = vrsqrt.pop %v84
  %v86 = vmul.f32 %v22, %v85
  %v88 = vsel %vm31, %v72, 0
  %v91 = vsel %vm31, %v73, 0
  %v94 = vsel %vm31, %v74, 0
  %v97 = vsel %vm31, %v75, 0
  %v100 = vsel %vm31, %v76, 0
  %v103 = vsel %vm31, %v77, 0
  %v106 = vsel %vm31, %v78, 0
  %v109 = vsel %vm31, %v79, 0
  %v112 = vsel %vm31, %v86, 0
  %114 = vmatprep.subr.mxu0 0.0
  %115 = vmatpush1.xpose.msra.mxu0 0.0
  %116 = vmatprep.subr.mxu0 0.0
  %117 = vmatpush1.xpose.msra.mxu0 0.0
  %118 = vmatprep.subr.mxu0 0.0
  %119 = vmatpush1.xpose.msra.mxu0 0.0
  %120 = vmatprep.subr.mxu0 0.0
  %121 = vmatpush1.xpose.msra.mxu0 0.0
  %122 = vmatprep.subr.mxu0 0.0
  %123 = vmatpush1.xpose.msra.mxu0 0.0
  %124 = vmatprep.subr.mxu0 0.0
  %125 = vmatpush1.xpose.msra.mxu0 0.0
  %126 = vmatprep.subr.mxu0 0.0
  %127 = vmatpush1.xpose.msra.mxu0 0.0
  %128 = vmatprep.subr.mxu0 0.0
  %129 = vmatpush1.xpose.msra.mxu0 0.0
  %130 = vmatprep.subr.mxu0 0.0
  %131 = vmatpush1.xpose.msra.mxu0 0.0
  %132 = vmatprep.subr.mxu0 0.0
  %133 = vmatpush1.xpose.msra.mxu0 0.0
  %134 = vmatprep.subr.mxu0 0.0
  %135 = vmatpush1.xpose.msra.mxu0 0.0
  %136 = vmatprep.subr.mxu0 0.0
  %137 = vmatpush1.xpose.msra.mxu0 0.0
  %138 = vmatprep.subr.mxu0 0.0
  %139 = vmatpush1.xpose.msra.mxu0 0.0
  %140 = vmatprep.subr.mxu0 0.0
  %141 = vmatpush1.xpose.msra.mxu0 0.0
  %142 = vmatprep.subr.mxu0 0.0
  %143 = vmatpush1.xpose.msra.mxu0 0.0
  %144 = vmatprep.subr.mxu0 0.0
  %145 = vmatpush1.xpose.msra.mxu0 %v112
  %146 = vmatprep.subr.mxu0 0.0
  %147 = vmatpush2.xpose.msra.mxu0 0.0
  %148 = vmatprep.subr.mxu0 0.0
  %149 = vmatpush2.xpose.msra.mxu0 0.0
  %150 = vmatprep.subr.mxu0 0.0
  %151 = vmatpush2.xpose.msra.mxu0 0.0
  %152 = vmatprep.subr.mxu0 0.0
  %153 = vmatpush2.xpose.msra.mxu0 0.0
  %154 = vmatprep.subr.mxu0 0.0
  %155 = vmatpush2.xpose.msra.mxu0 0.0
  %156 = vmatprep.subr.mxu0 0.0
  %157 = vmatpush2.xpose.msra.mxu0 0.0
  %158 = vmatprep.subr.mxu0 0.0
  %159 = vmatpush2.xpose.msra.mxu0 0.0
  %160 = vmatprep.subr.mxu0 0.0
  %161 = vmatpush2.xpose.msra.mxu0 0.0
  %162 = vmatprep.subr.mxu0 0.0
  %163 = vmatpush2.xpose.msra.mxu0 0.0
  %164 = vmatprep.subr.mxu0 0.0
  %165 = vmatpush2.xpose.msra.mxu0 0.0
  %166 = vmatprep.subr.mxu0 0.0
  %167 = vmatpush2.xpose.msra.mxu0 0.0
  %168 = vmatprep.subr.mxu0 0.0
  %169 = vmatpush2.xpose.msra.mxu0 0.0
  %170 = vmatprep.subr.mxu0 0.0
  %171 = vmatpush2.xpose.msra.mxu0 0.0
  %172 = vmatprep.subr.mxu0 0.0
  %173 = vmatpush2.xpose.msra.mxu0 0.0
  %174 = vmatprep.subr.mxu0 0.0
  %175 = vmatpush2.xpose.msra.mxu0 0.0
  %176 = vmatprep.subr.mxu0 0.0
  %177 = vmatpush2.xpose.msra.mxu0 0.0
  %178 = vmatprep.mubr.f32.mxu0 0.0
  %179 = vmatmul.mubr.f32.gmra.mxu0 %v88
  %v180 = vpop.f32.mrf.mxu0
  %v181 = vadd.f32 0.0, %v180
  %v182 = vpop.f32.mrf.mxu0
  %183 = vmatprep.mubr.f32.mxu0 0.0
  %184 = vmatmul.mubr.f32.gmra.mxu0 %v91
  %v185 = vpop.f32.mrf.mxu0
  %v186 = vadd.f32 0.0, %v185
  %v187 = vpop.f32.mrf.mxu0
  %188 = vmatprep.mubr.f32.mxu0 0.0
  %189 = vmatmul.mubr.f32.gmra.mxu0 %v94
  %v190 = vpop.f32.mrf.mxu0
  %v191 = vadd.f32 0.0, %v190
  %v192 = vpop.f32.mrf.mxu0
  %193 = vmatprep.mubr.f32.mxu0 0.0
  %194 = vmatmul.mubr.f32.gmra.mxu0 %v97
  %v195 = vpop.f32.mrf.mxu0
  %v196 = vadd.f32 0.0, %v195
  %v197 = vpop.f32.mrf.mxu0
  %198 = vmatprep.mubr.f32.mxu0 0.0
  %199 = vmatmul.mubr.f32.gmra.mxu0 %v100
  %v200 = vpop.f32.mrf.mxu0
  %v201 = vadd.f32 0.0, %v200
  %v202 = vpop.f32.mrf.mxu0
  %203 = vmatprep.mubr.f32.mxu0 0.0
  %204 = vmatmul.mubr.f32.gmra.mxu0 %v103
  %v205 = vpop.f32.mrf.mxu0
  %v206 = vadd.f32 0.0, %v205
  %v207 = vpop.f32.mrf.mxu0
  %208 = vmatprep.mubr.f32.mxu0 0.0
  %209 = vmatmul.mubr.f32.gmra.mxu0 %v106
  %v210 = vpop.f32.mrf.mxu0
  %v211 = vadd.f32 0.0, %v210
  %v212 = vpop.f32.mrf.mxu0
  %213 = vmatprep.mubr.f32.mxu0 0.0
  %214 = vmatmul.mubr.f32.gmra.mxu0 %v109
  %v215 = vpop.f32.mrf.mxu0
  %v216 = vadd.f32 0.0, %v215
  %v217 = vpop.f32.mrf.mxu0
  %218 = vdwg.mxu0
  %v219 = vlaneseq
  %v220 = vand.u32 %v219, 127
  %vm221 = vcmask 64512
  %v222 = vsel %vm221, %v181, -inf
  %223 = vmax.xlane.f32.xlu0 %v222
  %v224 = vpop.xlane.xlu0 %223
  %v225 = vsel %vm221, %v186, -inf
  %226 = vmax.xlane.f32.xlu0 %v225
  %v227 = vpop.xlane.xlu0 %226
  %v228 = vsel %vm221, %v191, -inf
  %229 = vmax.xlane.f32.xlu0 %v228
  %v230 = vpop.xlane.xlu0 %229
  %v231 = vsel %vm221, %v196, -inf
  %232 = vmax.xlane.f32.xlu0 %v231
  %v233 = vpop.xlane.xlu0 %232
  %v234 = vsel %vm221, %v201, -inf
  %235 = vmax.xlane.f32.xlu0 %v234
  %v236 = vpop.xlane.xlu0 %235
  %v237 = vsel %vm221, %v206, -inf
  %238 = vmax.xlane.f32.xlu0 %v237
  %v239 = vpop.xlane.xlu0 %238
  %v240 = vsel %vm221, %v211, -inf
  %241 = vmax.xlane.f32.xlu0 %v240
  %v242 = vpop.xlane.xlu0 %241
  %v243 = vsel %vm221, %v216, -inf
  %244 = vmax.xlane.f32.xlu0 %v243
  %v245 = vpop.xlane.xlu0 %244
  %vm246 = vcmp.ge.f32.partialorder %v181, %v224
  %vm247 = vcmp.ge.f32.partialorder %v186, %v227
  %vm248 = vcmp.ge.f32.partialorder %v191, %v230
  %vm249 = vcmp.ge.f32.partialorder %v196, %v233
  %vm250 = vcmp.ge.f32.partialorder %v201, %v236
  %vm251 = vcmp.ge.f32.partialorder %v206, %v239
  %vm252 = vcmp.ge.f32.partialorder %v211, %v242
  %vm253 = vcmp.ge.f32.partialorder %v216, %v245
  %v254 = vsel %vm246, %v220, 8
  %v255 = vsel %vm247, %v220, 8
  %v256 = vsel %vm248, %v220, 8
  %v257 = vsel %vm249, %v220, 8
  %v258 = vsel %vm250, %v220, 8
  %v259 = vsel %vm251, %v220, 8
  %v260 = vsel %vm252, %v220, 8
  %v261 = vsel %vm253, %v220, 8
  %v262 = vsel %vm221, %v254, 2147483647
  %v263 = vand.u32 %v262, 65535
  %v264 = vshra.s32 %v262, 16
  %v265 = vcvt.s32.f32 %v263
  %v266 = vcvt.s32.f32 %v264
  %267 = vmin.xlane.f32.xlu0 %v266
  %v268 = vpop.xlane.xlu0 %267
  %vm269 = vcmp.eq.f32.partialorder %v266, %v268
  %v270 = vsel %vm269, %v265, inf
  %271 = vmin.xlane.f32.xlu0 %v270
  %v272 = vpop.xlane.xlu0 %271
  %v273 = vcvt.f32.s32 %v272
  %v274 = vcvt.f32.s32 %v268
  %v275 = vshll.u32 %v274, 16
  %v276 = vadd.s32 %v275, %v273
  %v277 = vsel %vm221, %v255, 2147483647
  %v278 = vand.u32 %v277, 65535
  %v279 = vshra.s32 %v277, 16
  %v280 = vcvt.s32.f32 %v278
  %v281 = vcvt.s32.f32 %v279
  %282 = vmin.xlane.f32.xlu0 %v281
  %v283 = vpop.xlane.xlu0 %282
  %vm284 = vcmp.eq.f32.partialorder %v281, %v283
  %v285 = vsel %vm284, %v280, inf
  %286 = vmin.xlane.f32.xlu0 %v285
  %v287 = vpop.xlane.xlu0 %286
  %v288 = vcvt.f32.s32 %v287
  %v289 = vcvt.f32.s32 %v283
  %v290 = vshll.u32 %v289, 16
  %v291 = vadd.s32 %v290, %v288
  %v292 = vsel %vm221, %v256, 2147483647
  %v293 = vand.u32 %v292, 65535
  %v294 = vshra.s32 %v292, 16
  %v295 = vcvt.s32.f32 %v293
  %v296 = vcvt.s32.f32 %v294
  %297 = vmin.xlane.f32.xlu0 %v296
  %v298 = vpop.xlane.xlu0 %297
  %vm299 = vcmp.eq.f32.partialorder %v296, %v298
  %v300 = vsel %vm299, %v295, inf
  %301 = vmin.xlane.f32.xlu0 %v300
  %v302 = vpop.xlane.xlu0 %301
  %v303 = vcvt.f32.s32 %v302
  %v304 = vcvt.f32.s32 %v298
  %v305 = vshll.u32 %v304, 16
  %v306 = vadd.s32 %v305, %v303
  %v307 = vsel %vm221, %v257, 2147483647
  %v308 = vand.u32 %v307, 65535
  %v309 = vshra.s32 %v307, 16
  %v310 = vcvt.s32.f32 %v308
  %v311 = vcvt.s32.f32 %v309
  %312 = vmin.xlane.f32.xlu0 %v311
  %v313 = vpop.xlane.xlu0 %312
  %vm314 = vcmp.eq.f32.partialorder %v311, %v313
  %v315 = vsel %vm314, %v310, inf
  %316 = vmin.xlane.f32.xlu0 %v315
  %v317 = vpop.xlane.xlu0 %316
  %v318 = vcvt.f32.s32 %v317
  %v319 = vcvt.f32.s32 %v313
  %v320 = vshll.u32 %v319, 16
  %v321 = vadd.s32 %v320, %v318
  %v322 = vsel %vm221, %v258, 2147483647
  %v323 = vand.u32 %v322, 65535
  %v324 = vshra.s32 %v322, 16
  %v325 = vcvt.s32.f32 %v323
  %v326 = vcvt.s32.f32 %v324
  %327 = vmin.xlane.f32.xlu0 %v326
  %v328 = vpop.xlane.xlu0 %327
  %vm329 = vcmp.eq.f32.partialorder %v326, %v328
  %v330 = vsel %vm329, %v325, inf
  %331 = vmin.xlane.f32.xlu0 %v330
  %v332 = vpop.xlane.xlu0 %331
  %v333 = vcvt.f32.s32 %v332
  %v334 = vcvt.f32.s32 %v328
  %v335 = vshll.u32 %v334, 16
  %v336 = vadd.s32 %v335, %v333
  %v337 = vsel %vm221, %v259, 2147483647
  %v338 = vand.u32 %v337, 65535
  %v339 = vshra.s32 %v337, 16
  %v340 = vcvt.s32.f32 %v338
  %v341 = vcvt.s32.f32 %v339
  %342 = vmin.xlane.f32.xlu0 %v341
  %v343 = vpop.xlane.xlu0 %342
  %vm344 = vcmp.eq.f32.partialorder %v341, %v343
  %v345 = vsel %vm344, %v340, inf
  %346 = vmin.xlane.f32.xlu0 %v345
  %v347 = vpop.xlane.xlu0 %346
  %v348 = vcvt.f32.s32 %v347
  %v349 = vcvt.f32.s32 %v343
  %v350 = vshll.u32 %v349, 16
  %v351 = vadd.s32 %v350, %v348
  %v352 = vsel %vm221, %v260, 2147483647
  %v353 = vand.u32 %v352, 65535
  %v354 = vshra.s32 %v352, 16
  %v355 = vcvt.s32.f32 %v353
  %v356 = vcvt.s32.f32 %v354
  %357 = vmin.xlane.f32.xlu0 %v356
  %v358 = vpop.xlane.xlu0 %357
  %vm359 = vcmp.eq.f32.partialorder %v356, %v358
  %v360 = vsel %vm359, %v355, inf
  %361 = vmin.xlane.f32.xlu0 %v360
  %v362 = vpop.xlane.xlu0 %361
  %v363 = vcvt.f32.s32 %v362
  %v364 = vcvt.f32.s32 %v358
  %v365 = vshll.u32 %v364, 16
  %v366 = vadd.s32 %v365, %v363
  %v367 = vsel %vm221, %v261, 2147483647
  %v368 = vand.u32 %v367, 65535
  %v369 = vshra.s32 %v367, 16
  %v370 = vcvt.s32.f32 %v368
  %v371 = vcvt.s32.f32 %v369
  %372 = vmin.xlane.f32.xlu0 %v371
  %v373 = vpop.xlane.xlu0 %372
  %vm374 = vcmp.eq.f32.partialorder %v371, %v373
  %v375 = vsel %vm374, %v370, inf
  %376 = vmin.xlane.f32.xlu0 %v375
  %v377 = vpop.xlane.xlu0 %376
  %v378 = vcvt.f32.s32 %v377
  %v379 = vcvt.f32.s32 %v373
  %v380 = vshll.u32 %v379, 16
  %v381 = vadd.s32 %v380, %v378
  %vm382 = vcmp.eq.s32.totalorder %v220, %v276
  %vm383 = vcmp.eq.s32.totalorder %v220, %v291
  %vm384 = vcmp.eq.s32.totalorder %v220, %v306
  %vm385 = vcmp.eq.s32.totalorder %v220, %v321
  %vm386 = vcmp.eq.s32.totalorder %v220, %v336
  %vm387 = vcmp.eq.s32.totalorder %v220, %v351
  %vm388 = vcmp.eq.s32.totalorder %v220, %v366
  %vm389 = vcmp.eq.s32.totalorder %v220, %v381
  %v390 = vsel %vm382, 1, 0
  %v391 = vsel %vm383, 1, 0
  %v392 = vsel %vm384, 1, 0
  %v393 = vsel %vm385, 1, 0
  %v394 = vsel %vm386, 1, 0
  %v395 = vsel %vm387, 1, 0
  %v396 = vsel %vm388, 1, 0
  %v397 = vsel %vm389, 1, 0
  %v398 = vcvt.s32.f32 %v390
  %v399 = vcvt.s32.f32 %v391
  %v400 = vcvt.s32.f32 %v392
  %v401 = vcvt.s32.f32 %v393
  %v402 = vcvt.s32.f32 %v394
  %v403 = vcvt.s32.f32 %v395
  %v404 = vcvt.s32.f32 %v396
  %v405 = vcvt.s32.f32 %v397
  %vm406 = vcmask 269312
  %407 = vst.msk [vmem:[#allocation2] sm:$0xff] %vm406, 1.0
  %408 = vst.msk [vmem:[#allocation2 + $0x8] sm:$0xff] %vm406, 1.0
  %409 = vst.msk [vmem:[#allocation2 + $0x10] sm:$0xff] %vm406, 1.0
  %410 = vst.msk [vmem:[#allocation2 + $0x18] sm:$0xff] %vm406, 1.0
  %411 = vst.msk [vmem:[#allocation2 + $0x20] sm:$0xff] %vm406, 1.0
  %412 = vst.msk [vmem:[#allocation2 + $0x28] sm:$0xff] %vm406, 1.0
  %413 = vst.msk [vmem:[#allocation2 + $0x30] sm:$0xff] %vm406, 1.0
  %414 = vst.msk [vmem:[#allocation2 + $0x38] sm:$0xff] %vm406, 1.0
  %415 = vst.msk [vmem:[#allocation2] sm:$0xff] %vm31, %v72
  %416 = vst.msk [vmem:[#allocation2 + $0x8] sm:$0xff] %vm31, %v73
  %417 = vst.msk [vmem:[#allocation2 + $0x10] sm:$0xff] %vm31, %v74
  %418 = vst.msk [vmem:[#allocation2 + $0x18] sm:$0xff] %vm31, %v75
  %419 = vst.msk [vmem:[#allocation2 + $0x20] sm:$0xff] %vm31, %v76
  %420 = vst.msk [vmem:[#allocation2 + $0x28] sm:$0xff] %vm31, %v77
  %421 = vst.msk [vmem:[#allocation2 + $0x30] sm:$0xff] %vm31, %v78
  %422 = vst.msk [vmem:[#allocation2 + $0x38] sm:$0xff] %vm31, %v79
  %v423 = vld [vmem:[#allocation2] sm:$0xff]
  %v424 = vld [vmem:[#allocation2 + $0x8] sm:$0xff]
  %v425 = vld [vmem:[#allocation2 + $0x10] sm:$0xff]
  %v426 = vld [vmem:[#allocation2 + $0x18] sm:$0xff]
  %v427 = vld [vmem:[#allocation2 + $0x20] sm:$0xff]
  %v428 = vld [vmem:[#allocation2 + $0x28] sm:$0xff]
  %v429 = vld [vmem:[#allocation2 + $0x30] sm:$0xff]
  %v430 = vld [vmem:[#allocation2 + $0x38] sm:$0xff]
  %431 = vxpose.xlu0.b32.start [1/16] %v398, 128
  %432 = vxpose.xlu0.b32.cont [2/16] %v399, 128
  %433 = vxpose.xlu0.b32.cont [3/16] %v400, 128
  %434 = vxpose.xlu0.b32.cont [4/16] %v401, 128
  %435 = vxpose.xlu0.b32.cont [5/16] %v402, 128
  %436 = vxpose.xlu0.b32.cont [6/16] %v403, 128
  %437 = vxpose.xlu0.b32.cont [7/16] %v404, 128
  %438 = vxpose.xlu0.b32.cont [8/16] %v405, 128
  %439 = vxpose.xlu0.b32.cont [9/16] 0.0, 128
  %440 = vxpose.xlu0.b32.cont [10/16] 0.0, 128
  %441 = vxpose.xlu0.b32.cont [11/16] 0.0, 128
  %442 = vxpose.xlu0.b32.cont [12/16] 0.0, 128
  %443 = vxpose.xlu0.b32.cont [13/16] 0.0, 128
  %444 = vxpose.xlu0.b32.cont [14/16] 0.0, 128
  %445 = vxpose.xlu0.b32.cont [15/16] 0.0, 128
  %446 = vxpose.xlu0.b32.end [16/16] 0.0, 128
  %v447 = vpop.trf.xlu0
  %v448 = vpop.trf.xlu0
  %v449 = vpop.trf.xlu0
  %v450 = vpop.trf.xlu0
  %v451 = vpop.trf.xlu0
  %v452 = vpop.trf.xlu0
  %v453 = vpop.trf.xlu0
  %v454 = vpop.trf.xlu0
  %v455 = vpop.trf.xlu0
  %v456 = vpop.trf.xlu0
  %v457 = vpop.trf.xlu0
  %v458 = vpop.trf.xlu0
  %v459 = vpop.trf.xlu0
  %v460 = vpop.trf.xlu0
  %v461 = vpop.trf.xlu0
  %v462 = vpop.trf.xlu0
  %vm463 = vcmask 523264
  %v465 = vsel %vm463, %v447, 0
  %467 = vmatprep.subr.mxu0 0.0
  %468 = vmatpush1.msra.mxu0 0.0
  %469 = vmatprep.subr.mxu0 0.0
  %470 = vmatpush1.msra.mxu0 0.0
  %471 = vmatprep.subr.mxu0 0.0
  %472 = vmatpush1.msra.mxu0 0.0
  %473 = vmatprep.subr.mxu0 0.0
  %474 = vmatpush1.msra.mxu0 0.0
  %475 = vmatprep.subr.mxu0 0.0
  %476 = vmatpush1.msra.mxu0 0.0
  %477 = vmatprep.subr.mxu0 0.0
  %478 = vmatpush1.msra.mxu0 0.0
  %479 = vmatprep.subr.mxu0 0.0
  %480 = vmatpush1.msra.mxu0 0.0
  %481 = vmatprep.subr.mxu0 0.0
  %482 = vmatpush1.msra.mxu0 0.0
  %483 = vmatprep.subr.mxu0 0.0
  %484 = vmatpush1.msra.mxu0 %v430
  %485 = vmatprep.subr.mxu0 0.0
  %486 = vmatpush1.msra.mxu0 %v429
  %487 = vmatprep.subr.mxu0 0.0
  %488 = vmatpush1.msra.mxu0 %v428
  %489 = vmatprep.subr.mxu0 0.0
  %490 = vmatpush1.msra.mxu0 %v427
  %491 = vmatprep.subr.mxu0 0.0
  %492 = vmatpush1.msra.mxu0 %v426
  %493 = vmatprep.subr.mxu0 0.0
  %494 = vmatpush1.msra.mxu0 %v425
  %495 = vmatprep.subr.mxu0 0.0
  %496 = vmatpush1.msra.mxu0 %v424
  %497 = vmatprep.subr.mxu0 0.0
  %498 = vmatpush1.msra.mxu0 %v423
  %499 = vmatprep.subr.mxu0 0.0
  %500 = vmatpush2.msra.mxu0 0.0
  %501 = vmatprep.subr.mxu0 0.0
  %502 = vmatpush2.msra.mxu0 0.0
  %503 = vmatprep.subr.mxu0 0.0
  %504 = vmatpush2.msra.mxu0 0.0
  %505 = vmatprep.subr.mxu0 0.0
  %506 = vmatpush2.msra.mxu0 0.0
  %507 = vmatprep.subr.mxu0 0.0
  %508 = vmatpush2.msra.mxu0 0.0
  %509 = vmatprep.subr.mxu0 0.0
  %510 = vmatpush2.msra.mxu0 0.0
  %511 = vmatprep.subr.mxu0 0.0
  %512 = vmatpush2.msra.mxu0 0.0
  %513 = vmatprep.subr.mxu0 0.0
  %514 = vmatpush2.msra.mxu0 0.0
  %515 = vmatprep.subr.mxu0 0.0
  %516 = vmatpush2.msra.mxu0 0.0
  %517 = vmatprep.subr.mxu0 0.0
  %518 = vmatpush2.msra.mxu0 0.0
  %519 = vmatprep.subr.mxu0 0.0
  %520 = vmatpush2.msra.mxu0 0.0
  %521 = vmatprep.subr.mxu0 0.0
  %522 = vmatpush2.msra.mxu0 0.0
  %523 = vmatprep.subr.mxu0 0.0
  %524 = vmatpush2.msra.mxu0 0.0
  %525 = vmatprep.subr.mxu0 0.0
  %526 = vmatpush2.msra.mxu0 0.0
  %527 = vmatprep.subr.mxu0 0.0
  %528 = vmatpush2.msra.mxu0 0.0
  %529 = vmatprep.subr.mxu0 0.0
  %530 = vmatpush2.msra.mxu0 0.0
  %531 = vmatprep.mubr.f32.mxu0 0.0
  %532 = vmatmul.mubr.f32.gmra.mxu0 %v465
  %v533 = vpop.f32.mrf.mxu0
  %v534 = vadd.f32 0.0, %v533
  %v535 = vpop.f32.mrf.mxu0
  %536 = vdwg.mxu0
  %v537 = vmul.f32 %v534, %v534
  %v538 = vsel %vm31, %v537, 0.0
  %539 = vadd.xlane.f32.xlu0 %v538
  %v540 = vpop.xlane.xlu0 %539
  %v541 = vmax.f32 %v540, 1e-24
  %v542 = vrsqrt.pop %v541
  %v543 = vmul.f32 %v534, %v542
  %vm544 = vcmp.eq.f32.partialorder %v534, 0.0
  %v545 = vsel %vm544, 1, 0
  %546 = vset.pattern.permute.xlu0 32
  %547 = vperm.xlu0 %546, %v545
  %v548 = vpop.permute.xlu0 %547
  %vm549 = vcmp.eq.s32.totalorder %v548, 1
  %v550 = vsel %vm549, %v86, %v543
  %v551 = vld [vmem:[%s2] sm:$0xff]
  %v552 = vld [vmem:[%s2 + $0x8] sm:$0xff]
  %v553 = vld [vmem:[%s2 + $0x10] sm:$0xff]
  %v554 = vld [vmem:[%s2 + $0x18] sm:$0xff]
  %v555 = vld [vmem:[%s2 + $0x20] sm:$0xff]
  %v556 = vld [vmem:[%s2 + $0x28] sm:$0xff]
  %v557 = vld [vmem:[%s2 + $0x30] sm:$0xff]
  %v558 = vld [vmem:[%s2 + $0x38] sm:$0xff]
  %v560 = vsel %vm31, %v550, 0
  %v563 = vsel %vm31, %v551, 0
  %v566 = vsel %vm31, %v552, 0
  %v569 = vsel %vm31, %v553, 0
  %v572 = vsel %vm31, %v554, 0
  %v575 = vsel %vm31, %v555, 0
  %v578 = vsel %vm31, %v556, 0
  %v581 = vsel %vm31, %v557, 0
  %v584 = vsel %vm31, %v558, 0
  %586 = vmatprep.subr.mxu0 0.0
  %587 = vmatpush1.xpose.msra.mxu0 0.0
  %588 = vmatprep.subr.mxu0 0.0
  %589 = vmatpush1.xpose.msra.mxu0 0.0
  %590 = vmatprep.subr.mxu0 0.0
  %591 = vmatpush1.xpose.msra.mxu0 0.0
  %592 = vmatprep.subr.mxu0 0.0
  %593 = vmatpush1.xpose.msra.mxu0 0.0
  %594 = vmatprep.subr.mxu0 0.0
  %595 = vmatpush1.xpose.msra.mxu0 0.0
  %596 = vmatprep.subr.mxu0 0.0
  %597 = vmatpush1.xpose.msra.mxu0 0.0
  %598 = vmatprep.subr.mxu0 0.0
  %599 = vmatpush1.xpose.msra.mxu0 0.0
  %600 = vmatprep.subr.mxu0 0.0
  %601 = vmatpush1.xpose.msra.mxu0 0.0
  %602 = vmatprep.subr.mxu0 0.0
  %603 = vmatpush1.xpose.msra.mxu0 %v584
  %604 = vmatprep.subr.mxu0 0.0
  %605 = vmatpush1.xpose.msra.mxu0 %v581
  %606 = vmatprep.subr.mxu0 0.0
  %607 = vmatpush1.xpose.msra.mxu0 %v578
  %608 = vmatprep.subr.mxu0 0.0
  %609 = vmatpush1.xpose.msra.mxu0 %v575
  %610 = vmatprep.subr.mxu0 0.0
  %611 = vmatpush1.xpose.msra.mxu0 %v572
  %612 = vmatprep.subr.mxu0 0.0
  %613 = vmatpush1.xpose.msra.mxu0 %v569
  %614 = vmatprep.subr.mxu0 0.0
  %615 = vmatpush1.xpose.msra.mxu0 %v566
  %616 = vmatprep.subr.mxu0 0.0
  %617 = vmatpush1.xpose.msra.mxu0 %v563
  %618 = vmatprep.subr.mxu0 0.0
  %619 = vmatpush2.xpose.msra.mxu0 0.0
  %620 = vmatprep.subr.mxu0 0.0
  %621 = vmatpush2.xpose.msra.mxu0 0.0
  %622 = vmatprep.subr.mxu0 0.0
  %623 = vmatpush2.xpose.msra.mxu0 0.0
  %624 = vmatprep.subr.mxu0 0.0
  %625 = vmatpush2.xpose.msra.mxu0 0.0
  %626 = vmatprep.subr.mxu0 0.0
  %627 = vmatpush2.xpose.msra.mxu0 0.0
  %628 = vmatprep.subr.mxu0 0.0
  %629 = vmatpush2.xpose.msra.mxu0 0.0
  %630 = vmatprep.subr.mxu0 0.0
  %631 = vmatpush2.xpose.msra.mxu0 0.0
  %632 = vmatprep.subr.mxu0 0.0
  %633 = vmatpush2.xpose.msra.mxu0 0.0
  %634 = vmatprep.subr.mxu0 0.0
  %635 = vmatpush2.xpose.msra.mxu0 0.0
  %636 = vmatprep.subr.mxu0 0.0
  %637 = vmatpush2.xpose.msra.mxu0 0.0
  %638 = vmatprep.subr.mxu0 0.0
  %639 = vmatpush2.xpose.msra.mxu0 0.0
  %640 = vmatprep.subr.mxu0 0.0
  %641 = vmatpush2.xpose.msra.mxu0 0.0
  %642 = vmatprep.subr.mxu0 0.0
  %643 = vmatpush2.xpose.msra.mxu0 0.0
  %644 = vmatprep.subr.mxu0 0.0
  %645 = vmatpush2.xpose.msra.mxu0 0.0
  %646 = vmatprep.subr.mxu0 0.0
  %647 = vmatpush2.xpose.msra.mxu0 0.0
  %648 = vmatprep.subr.mxu0 0.0
  %649 = vmatpush2.xpose.msra.mxu0 0.0
  %650 = vmatprep.mubr.f32.mxu0 0.0
  %651 = vmatmul.mubr.f32.gmra.mxu0 %v560
  %v652 = vpop.f32.mrf.mxu0
  %v653 = vadd.f32 0.0, %v652
  %v654 = vpop.f32.mrf.mxu0
  %655 = vdwg.mxu0
  %656 = vst.msk [vmem:[%s3] sm:$0xff] %vm31, %v550
  %658 = vrot.lane.b32.xlu0 %v653, 32
  %v659 = vpop.permute.xlu0 %658
  %vm661 = vcmask 785664
  %662 = vst.msk [vmem:[%s3] sm:$0xff] %vm661, %v659
  // Predicated region
  $region14: #{irca_forward.1} parent=0 // pred_check
    _
  $region15: #{irca_forward.1} parent=0 // pred_check_branch
    %664 = sbr.rel (0) target = $region17
  $region16: #{irca_forward.1} parent=0 // pred_region
    _
  $region17: #{irca_forward.1} parent=0 // pred_fallthru
    _
  // Predicated region
  $region18: #{irca_forward.1} parent=0 // pred_check
    _
  $region19: #{irca_forward.1} parent=0 // pred_check_branch
    %666 = sbr.rel (0) target = $region21
  $region20: #{irca_forward.1} parent=0 // pred_region
    _
  $region21: #{irca_forward.1} parent=0 // pred_fallthru
    _

</llo_original>
